<compile_context>
chip_gen: v7x
topology: tpu7x:2x2x1
jax: 0.10.0
libtpu: 0.0.40
codegen_flags: <defaults>
</compile_context>

<pallas_src>
import functools

import jax
import jax.numpy as jnp
from jax import lax
from jax.experimental import pallas as pl
from jax.experimental.pallas import tpu as pltpu


# ------------------------------ Pallas kernel ------------------------------ #

def _fused_stem_kernel(p_ref, w_ref, b_ref, o_ref, *, pw):
    # p_ref: (1, 4, K, PHW) bf16  parity-split im2col patches of ONE image:
    #          p_ref[0, 2*qh+qw, k, i*pw+j] = x_pad[ci, 2*(2i+qh)+kh, 2*(2j+qw)+kw],
    #          k = (kh, kw, ci) flattened.
    # w_ref: (Cout, K)      bf16  conv1 weight with eval-BN scale folded in (resident)
    # b_ref: (Cout, 1)      f32   folded BN bias (resident)
    # o_ref: (1, Cout, PHW) f32   pooled output, PH*PW flat on the lane axis (lane-dense store)
    w = w_ref[...]
    b = b_ref[...]
    phw = o_ref.shape[2]

    # Lane-index masks for the pool shifts (computed once; broadcast over sublanes in the selects).
    col = lax.broadcasted_iota(jnp.int32, (1, phw), 1)
    w_keep = (col % pw) != 0          # lane has a valid "previous column" in the same conv row
    h_keep = col >= pw                # lane has a valid "previous pooled row"

    def plane(q):  # conv + BN + ReLU of one (oh%2, ow%2) parity plane -> (Cout, PHW) f32
        acc = jnp.dot(w, p_ref[0, q, :, :], preferred_element_type=jnp.float32)
        return jnp.maximum(acc + b, 0.0)

    def shift_w(t):  # t[c, i, j] -> t[c, i, j-1], 0 at j == 0 (exact: post-ReLU, pool pad behaves as 0)
        return jnp.where(w_keep, pltpu.roll(t, 1, axis=1), 0.0)

    def shift_h(t):  # t[c, i, j] -> t[c, i-1, j], 0 at i == 0
        return jnp.where(h_keep, pltpu.roll(t, pw, axis=1), 0.0)

    # Parity planes, index q = 2*(oh%2) + (ow%2).
    y01 = plane(1)
    row_even = jnp.maximum(jnp.maximum(plane(0), y01), shift_w(y01))      # conv row 2i,   cols 2j-1..2j+1
    y11 = plane(3)
    row_odd = jnp.maximum(jnp.maximum(plane(2), y11), shift_w(y11))       # conv row 2i+1, cols 2j-1..2j+1
    out = jnp.maximum(jnp.maximum(row_even, row_odd), shift_h(row_odd))   # + conv row 2i-1
    o_ref[0, :, :] = out.astype(o_ref.dtype)


# ------------------------------- wrappers ----------------------------------- #

def _im2col_parity(x_nchw, dtype):
    """Parity-split transposed im2col patches, shape (N, 4, K, PH*PW).

    K ordered (kh, kw, ci); parity axis q = 2*(oh%2) + (ow%2); lane axis m = (oh//2)*PW + (ow//2).
    Built from strided slices only (XLA side)."""
    N, Cin, H, W = x_nchw.shape
    KH = KW = 7
    pad = 3
    OH = (H + 2 * pad - KH) // 2 + 1
    OW = (W + 2 * pad - KW) // 2 + 1
    assert OH % 2 == 0 and OW % 2 == 0, "parity-split pool layout assumes even conv output size"
    PH, PW = OH // 2, OW // 2

    xp = jnp.pad(x_nchw, ((0, 0), (0, 0), (pad, pad), (pad, pad))).astype(dtype)

    taps = []
    for kh in range(KH):
        for kw in range(KW):
            planes = []
            for qh in (0, 1):
                for qw in (0, 1):
                    h0 = kh + 2 * qh
                    w0 = kw + 2 * qw
                    v = xp[:, :,
                           h0:h0 + 4 * (PH - 1) + 1:4,
                           w0:w0 + 4 * (PW - 1) + 1:4]          # (N, Cin, PH, PW)
                    planes.append(v)
            taps.append(jnp.stack(planes, axis=1))               # (N, 4, Cin, PH, PW)
    P = jnp.stack(taps, axis=2)                                  # (N, 4, 49, Cin, PH, PW)
    return P.reshape(N, 4, KH * KW * Cin, PH * PW), (PH, PW)


def fused_conv_bn_relu_pool(patches, w2, bias, *, pw):
    N, Q, K, PHW = patches.shape
    Cout = w2.shape[0]
    kernel = functools.partial(_fused_stem_kernel, pw=pw)
    return pl.pallas_call(
        kernel,
        out_shape=jax.ShapeDtypeStruct((N, Cout, PHW), jnp.float32),
        grid=(N,),
        in_specs=[
            pl.BlockSpec((1, 4, K, PHW), lambda n: (n, 0, 0, 0)),   # one image's parity patches
            pl.BlockSpec((Cout, K), lambda n: (0, 0)),              # resident folded weights
            pl.BlockSpec((Cout, 1), lambda n: (0, 0)),              # resident folded bias
        ],
        out_specs=pl.BlockSpec((1, Cout, PHW), lambda n: (n, 0, 0)),
        compiler_params=pltpu.CompilerParams(
            dimension_semantics=("parallel",),
            vmem_limit_bytes=32 * 1024 * 1024,   # ~17 MB/step at 224x224; safe on v5e/v6e/v7x
        ),
    )(patches, w2, bias)


@jax.jit
def visible_module_forward(x_nchw, conv1_w, bn_gamma, bn_beta, bn_mean, bn_var):
    eps = 1e-5
    N = x_nchw.shape[0]
    Cout = conv1_w.shape[0]

    # eval-mode BatchNorm folded: scale into the conv weights (f32, then bf16), bias kept f32.
    scale = bn_gamma / jnp.sqrt(bn_var + eps)
    bias = (bn_beta - bn_mean * scale).astype(jnp.float32).reshape(Cout, 1)
    w2 = (jnp.transpose(conv1_w, (0, 2, 3, 1)).reshape(Cout, -1)
          * scale[:, None]).astype(jnp.bfloat16)                  # (Cout, K), K = (kh, kw, ci)

    # bf16 GEMM operands; f32 accumulation + epilogue + pool happen inside the kernel.
    patches, (PH, PW) = _im2col_parity(x_nchw, jnp.bfloat16)
    out_flat = fused_conv_bn_relu_pool(patches, w2, bias, pw=PW)  # (N, Cout, PH*PW)
    return out_flat.reshape(N, Cout, PH, PW)                      # free metadata reshape


# --------------------------- pure-JAX reference ----------------------------- #

def reference_forward(x, w, gamma, beta, mean, var, *, eps=1e-5, match_kernel_rounding=True):
    scale = gamma / jnp.sqrt(var + eps)
    bias = beta - mean * scale
    if match_kernel_rounding:
        # same operand rounding as the kernel: bf16 x, bf16 scale-folded w, f32 accumulation
        x = x.astype(jnp.bfloat16).astype(jnp.float32)
        w = (w * scale[:, None, None, None]).astype(jnp.bfloat16).astype(jnp.float32)
        y = lax.conv_general_dilated(
            x, w, window_strides=(2, 2), padding=((3, 3), (3, 3)),
            dimension_numbers=("NCHW", "OIHW", "NCHW"),
            precision=lax.Precision.HIGHEST)
        y = y + bias[None, :, None, None]
    else:
        y = lax.conv_general_dilated(
            x, w, window_strides=(2, 2), padding=((3, 3), (3, 3)),
            dimension_numbers=("NCHW", "OIHW", "NCHW"),
            precision=lax.Precision.HIGHEST)
        y = y * scale[None, :, None, None] + bias[None, :, None, None]
    y = jnp.maximum(y, 0.0)
    return lax.reduce_window(
        y, -jnp.inf, lax.max,
        window_dimensions=(1, 1, 3, 3), window_strides=(1, 1, 2, 2),
        padding=((0, 0), (0, 0), (1, 1), (1, 1)))


if __name__ == "__main__":
    key = jax.random.PRNGKey(0)
    k_x, k_w, k_g, k_b, k_m, k_v, k_x2 = jax.random.split(key, 7)

    # small shapes consistent with the ResNet-50 stem: 3 input channels, 64 output channels
    N, Cin, H, W = 2, 3, 32, 32
    Cout, KH, KW = 64, 7, 7

    x = jax.random.normal(k_x, (N, Cin, H, W), dtype=jnp.float32)
    conv1_w = jax.random.normal(k_w, (Cout, Cin, KH, KW), dtype=jnp.float32) * 0.05
    bn_gamma = jax.random.uniform(k_g, (Cout,), jnp.float32, 0.5, 1.5)
    bn_beta = jax.random.normal(k_b, (Cout,), jnp.float32) * 0.1
    bn_mean = jax.random.normal(k_m, (Cout,), jnp.float32) * 0.1
    bn_var = jax.random.uniform(k_v, (Cout,), jnp.float32, 0.5, 1.5)
    # NOTE: BatchNorm is evaluated in inference mode (running stats folded into weights/bias).

    out = visible_module_forward(x, conv1_w, bn_gamma, bn_beta, bn_mean, bn_var)
    out = jax.block_until_ready(out)

    # primary check: exact-path reference using the same bf16-rounded, scale-folded conv operands
    ref = reference_forward(x, conv1_w, bn_gamma, bn_beta, bn_mean, bn_var,
                            match_kernel_rounding=True)
    assert out.shape == ref.shape == (N, Cout, 8, 8), (out.shape, ref.shape)
    assert jnp.allclose(out, ref, rtol=1e-4, atol=1e-4), float(jnp.max(jnp.abs(out - ref)))

    # sanity check vs. the pure-f32 module semantics (difference = bf16 operand rounding only)
    ref32 = reference_forward(x, conv1_w, bn_gamma, bn_beta, bn_mean, bn_var,
                              match_kernel_rounding=False)
    assert jnp.allclose(out, ref32, rtol=5e-2, atol=5e-2), float(jnp.max(jnp.abs(out - ref32)))

    # second (still small) shape exercising the multi-vreg lane-roll / lane-dense path (PH*PW = 256)
    x2 = jax.random.normal(k_x2, (N, Cin, 64, 64), dtype=jnp.float32)
    out2 = jax.block_until_ready(
        visible_module_forward(x2, conv1_w, bn_gamma, bn_beta, bn_mean, bn_var))
    ref2 = reference_forward(x2, conv1_w, bn_gamma, bn_beta, bn_mean, bn_var,
                             match_kernel_rounding=True)
    assert out2.shape == ref2.shape == (N, Cout, 16, 16), (out2.shape, ref2.shape)
    assert jnp.allclose(out2, ref2, rtol=1e-4, atol=1e-4), float(jnp.max(jnp.abs(out2 - ref2)))

    print("KERNEL_OK")
</pallas_src>

<mosaic_0001>
module attributes {stable_mosaic.version = 11 : i64} {
  func.func @_fused_stem_kernel(%arg0: i32, %arg1: memref<1x4x147x64xbf16, #tpu.memory_space<vmem>>, %arg2: memref<64x147xbf16, #tpu.memory_space<vmem>>, %arg3: memref<64x1xf32, #tpu.memory_space<vmem>>, %arg4: memref<1x64x64xf32, #tpu.memory_space<vmem>>) attributes {dimension_semantics = [#tpu.dimension_semantics<parallel>], iteration_bounds = array<i64: 2>, scalar_prefetch = 0 : i64, scratch_operands = 0 : i64, tpu.core_type = #tpu.core_type<tc>, window_params = [{transform_indices = @transform_0, window_bounds = array<i64: 1, 4, 147, 64>}, {pipeline_mode = #tpu.pipeline_mode<synchronous>, transform_indices = @transform_1, window_bounds = array<i64: 64, 147>}, {pipeline_mode = #tpu.pipeline_mode<synchronous>, transform_indices = @transform_2, window_bounds = array<i64: 64, 1>}, {transform_indices = @transform_3, window_bounds = array<i64: 1, 64, 64>}]} {
    %c0 = arith.constant 0 : index
    %c0_0 = arith.constant 0 : index
    %0 = vector.load %arg2[%c0, %c0_0] : memref<64x147xbf16, #tpu.memory_space<vmem>>, vector<64x147xbf16>
    %c0_1 = arith.constant 0 : index
    %c0_2 = arith.constant 0 : index
    %1 = vector.load %arg3[%c0_1, %c0_2] : memref<64x1xf32, #tpu.memory_space<vmem>>, vector<64x1xf32>
    %2 = tpu.iota {dimensions = array<i32: 1>} : vector<1x64xi32>
    %c8_i32 = arith.constant 8 : i32
    %c0_i32 = arith.constant 0 : i32
    %3 = arith.cmpi eq, %c8_i32, %c0_i32 : i32
    %c1_i32 = arith.constant 1 : i32
    %4 = arith.select %3, %c1_i32, %c8_i32 : i32
    %5 = vector.broadcast %4 : i32 to vector<1x64xi32>
    %6 = arith.remsi %2, %5 : vector<1x64xi32>
    %c0_i32_3 = arith.constant 0 : i32
    %7 = vector.broadcast %c0_i32_3 : i32 to vector<1x64xi32>
    %8 = arith.cmpi ne, %6, %7 : vector<1x64xi32>
    %c0_i32_4 = arith.constant 0 : i32
    %9 = vector.broadcast %c0_i32_4 : i32 to vector<1x64xi32>
    %10 = arith.cmpi slt, %6, %9 : vector<1x64xi32>
    %c0_i32_5 = arith.constant 0 : i32
    %11 = arith.cmpi slt, %4, %c0_i32_5 : i32
    %12 = vector.broadcast %11 : i1 to vector<1x64xi1>
    %13 = vector.broadcast %12 : vector<1x64xi1> to vector<1x64xi1>
    %14 = arith.xori %10, %13 : vector<1x64xi1>
    %15 = arith.andi %14, %8 : vector<1x64xi1>
    %16 = vector.broadcast %4 : i32 to vector<1x64xi32>
    %17 = arith.addi %6, %16 : vector<1x64xi32>
    %18 = arith.select %15, %17, %6 : vector<1x64xi1>, vector<1x64xi32>
    %c0_i32_6 = arith.constant 0 : i32
    %19 = vector.broadcast %c0_i32_6 : i32 to vector<1x64xi32>
    %20 = arith.cmpi ne, %18, %19 : vector<1x64xi32>
    %c8_i32_7 = arith.constant 8 : i32
    %21 = vector.broadcast %c8_i32_7 : i32 to vector<1x64xi32>
    %22 = arith.cmpi sge, %2, %21 : vector<1x64xi32>
    %c0_8 = arith.constant 0 : index
    %c1 = arith.constant 1 : index
    %c0_9 = arith.constant 0 : index
    %c0_10 = arith.constant 0 : index
    %23 = vector.load %arg1[%c0_8, %c1, %c0_9, %c0_10] : memref<1x4x147x64xbf16, #tpu.memory_space<vmem>>, vector<1x1x147x64xbf16>
    %24 = vector.shape_cast %23 : vector<1x1x147x64xbf16> to vector<147x64xbf16>
    %cst = arith.constant dense<0.000000e+00> : vector<64x64xf32>
    %25 = tpu.matmul %0, %24, %cst {dimension_numbers = #tpu.dot_dimension_numbers<[1], [0], [0], [1], [0, 0, 1, 1], [], []>} : vector<64x147xbf16>, vector<147x64xbf16>, vector<64x64xf32> -> vector<64x64xf32>
    %26 = vector.broadcast %1 : vector<64x1xf32> to vector<64x64xf32>
    %27 = arith.addf %25, %26 : vector<64x64xf32>
    %cst_11 = arith.constant 0.000000e+00 : f32
    %28 = vector.broadcast %cst_11 : f32 to vector<64x64xf32>
    %29 = arith.maximumf %27, %28 : vector<64x64xf32>
    %c0_12 = arith.constant 0 : index
    %c0_13 = arith.constant 0 : index
    %c0_14 = arith.constant 0 : index
    %c0_15 = arith.constant 0 : index
    %30 = vector.load %arg1[%c0_12, %c0_13, %c0_14, %c0_15] : memref<1x4x147x64xbf16, #tpu.memory_space<vmem>>, vector<1x1x147x64xbf16>
    %31 = vector.shape_cast %30 : vector<1x1x147x64xbf16> to vector<147x64xbf16>
    %cst_16 = arith.constant dense<0.000000e+00> : vector<64x64xf32>
    %32 = tpu.matmul %0, %31, %cst_16 {dimension_numbers = #tpu.dot_dimension_numbers<[1], [0], [0], [1], [0, 0, 1, 1], [], []>} : vector<64x147xbf16>, vector<147x64xbf16>, vector<64x64xf32> -> vector<64x64xf32>
    %33 = vector.broadcast %1 : vector<64x1xf32> to vector<64x64xf32>
    %34 = arith.addf %32, %33 : vector<64x64xf32>
    %cst_17 = arith.constant 0.000000e+00 : f32
    %35 = vector.broadcast %cst_17 : f32 to vector<64x64xf32>
    %36 = arith.maximumf %34, %35 : vector<64x64xf32>
    %37 = arith.maximumf %36, %29 : vector<64x64xf32>
    %c1_i32_18 = arith.constant 1 : i32
    %38 = tpu.dynamic_rotate %29 by %c1_i32_18 dim 1 : vector<64x64xf32>, i32 -> vector<64x64xf32>
    %cst_19 = arith.constant 0.000000e+00 : f32
    %39 = vector.shape_cast %20 : vector<1x64xi1> to vector<1x64xi1>
    %40 = vector.broadcast %39 : vector<1x64xi1> to vector<64x64xi1>
    %41 = vector.broadcast %cst_19 : f32 to vector<64x64xf32>
    %42 = arith.select %40, %38, %41 : vector<64x64xi1>, vector<64x64xf32>
    %43 = arith.maximumf %37, %42 : vector<64x64xf32>
    %c0_20 = arith.constant 0 : index
    %c3 = arith.constant 3 : index
    %c0_21 = arith.constant 0 : index
    %c0_22 = arith.constant 0 : index
    %44 = vector.load %arg1[%c0_20, %c3, %c0_21, %c0_22] : memref<1x4x147x64xbf16, #tpu.memory_space<vmem>>, vector<1x1x147x64xbf16>
    %45 = vector.shape_cast %44 : vector<1x1x147x64xbf16> to vector<147x64xbf16>
    %cst_23 = arith.constant dense<0.000000e+00> : vector<64x64xf32>
    %46 = tpu.matmul %0, %45, %cst_23 {dimension_numbers = #tpu.dot_dimension_numbers<[1], [0], [0], [1], [0, 0, 1, 1], [], []>} : vector<64x147xbf16>, vector<147x64xbf16>, vector<64x64xf32> -> vector<64x64xf32>
    %47 = vector.broadcast %1 : vector<64x1xf32> to vector<64x64xf32>
    %48 = arith.addf %46, %47 : vector<64x64xf32>
    %cst_24 = arith.constant 0.000000e+00 : f32
    %49 = vector.broadcast %cst_24 : f32 to vector<64x64xf32>
    %50 = arith.maximumf %48, %49 : vector<64x64xf32>
    %c0_25 = arith.constant 0 : index
    %c2 = arith.constant 2 : index
    %c0_26 = arith.constant 0 : index
    %c0_27 = arith.constant 0 : index
    %51 = vector.load %arg1[%c0_25, %c2, %c0_26, %c0_27] : memref<1x4x147x64xbf16, #tpu.memory_space<vmem>>, vector<1x1x147x64xbf16>
    %52 = vector.shape_cast %51 : vector<1x1x147x64xbf16> to vector<147x64xbf16>
    %cst_28 = arith.constant dense<0.000000e+00> : vector<64x64xf32>
    %53 = tpu.matmul %0, %52, %cst_28 {dimension_numbers = #tpu.dot_dimension_numbers<[1], [0], [0], [1], [0, 0, 1, 1], [], []>} : vector<64x147xbf16>, vector<147x64xbf16>, vector<64x64xf32> -> vector<64x64xf32>
    %54 = vector.broadcast %1 : vector<64x1xf32> to vector<64x64xf32>
    %55 = arith.addf %53, %54 : vector<64x64xf32>
    %cst_29 = arith.constant 0.000000e+00 : f32
    %56 = vector.broadcast %cst_29 : f32 to vector<64x64xf32>
    %57 = arith.maximumf %55, %56 : vector<64x64xf32>
    %58 = arith.maximumf %57, %50 : vector<64x64xf32>
    %c1_i32_30 = arith.constant 1 : i32
    %59 = tpu.dynamic_rotate %50 by %c1_i32_30 dim 1 : vector<64x64xf32>, i32 -> vector<64x64xf32>
    %cst_31 = arith.constant 0.000000e+00 : f32
    %60 = vector.shape_cast %20 : vector<1x64xi1> to vector<1x64xi1>
    %61 = vector.broadcast %60 : vector<1x64xi1> to vector<64x64xi1>
    %62 = vector.broadcast %cst_31 : f32 to vector<64x64xf32>
    %63 = arith.select %61, %59, %62 : vector<64x64xi1>, vector<64x64xf32>
    %64 = arith.maximumf %58, %63 : vector<64x64xf32>
    %65 = arith.maximumf %43, %64 : vector<64x64xf32>
    %c8_i32_32 = arith.constant 8 : i32
    %66 = tpu.dynamic_rotate %64 by %c8_i32_32 dim 1 : vector<64x64xf32>, i32 -> vector<64x64xf32>
    %cst_33 = arith.constant 0.000000e+00 : f32
    %67 = vector.shape_cast %22 : vector<1x64xi1> to vector<1x64xi1>
    %68 = vector.broadcast %67 : vector<1x64xi1> to vector<64x64xi1>
    %69 = vector.broadcast %cst_33 : f32 to vector<64x64xf32>
    %70 = arith.select %68, %66, %69 : vector<64x64xi1>, vector<64x64xf32>
    %71 = arith.maximumf %65, %70 : vector<64x64xf32>
    %c0_34 = arith.constant 0 : index
    %c0_35 = arith.constant 0 : index
    %c0_36 = arith.constant 0 : index
    %72 = vector.load %arg4[%c0_34, %c0_35, %c0_36] : memref<1x64x64xf32, #tpu.memory_space<vmem>>, vector<1x64x64xf32>
    %73 = vector.shape_cast %72 : vector<1x64x64xf32> to vector<64x64xf32>
    %74 = vector.shape_cast %71 : vector<64x64xf32> to vector<1x64x64xf32>
    tpu.vector_store %arg4[%c0_34, %c0_35, %c0_36], %74 {strides = array<i32>} : memref<1x64x64xf32, #tpu.memory_space<vmem>>, vector<1x64x64xf32>,
    return
  }
  func.func @transform_0(%arg0: i32) -> (i32, i32, i32, i32) {
    %c0_i32 = arith.constant 0 : i32
    %c0_i32_0 = arith.constant 0 : i32
    %c0_i32_1 = arith.constant 0 : i32
    %c0_i32_2 = arith.constant 0 : i32
    return %arg0, %c0_i32, %c0_i32_0, %c0_i32_1 : i32, i32, i32, i32
  }
  func.func @transform_1(%arg0: i32) -> (i32, i32) {
    %c0_i32 = arith.constant 0 : i32
    %c0_i32_0 = arith.constant 0 : i32
    %c0_i32_1 = arith.constant 0 : i32
    return %c0_i32, %c0_i32_0 : i32, i32
  }
  func.func @transform_2(%arg0: i32) -> (i32, i32) {
    %c0_i32 = arith.constant 0 : i32
    %c0_i32_0 = arith.constant 0 : i32
    %c0_i32_1 = arith.constant 0 : i32
    return %c0_i32, %c0_i32_0 : i32, i32
  }
  func.func @transform_3(%arg0: i32) -> (i32, i32, i32) {
    %c0_i32 = arith.constant 0 : i32
    %c0_i32_0 = arith.constant 0 : i32
    %c0_i32_1 = arith.constant 0 : i32
    return %arg0, %c0_i32, %c0_i32_0 : i32, i32, i32
  }
}

</mosaic_0001>

<llo_original>
// kernel: visible_module_forward.1
$region0: #{visible_module_forward.1}
  #allocation0 [shape = 'u32[]', space=smem, size = 0x4, offset = 0x4, fixed_abs, tag = 'smem constant byte address 0x4 - core index']
  #allocation1 [shape = 'u32[144,128]{1,0:T(1,128)}', space=vmem, size = 0x12000, scoped, tag = 'internal scratch']
  %s0 = inlined_call_operand.vmem [shape: bf16[2,4,147,64], index: 0, kind: input, shape index: {}]
  %s1 = inlined_call_operand.vmem [shape: bf16[64,147], index: 1, kind: input, shape index: {}]
  %s2 = inlined_call_operand.vmem [shape: f32[64,1], index: 2, kind: input, shape index: {}]
  %s3 = inlined_call_operand.vmem [shape: f32[2,64,64], index: 3, kind: output, shape index: {}]
  %s4 = sld [smem:[#allocation0]]
  $region45: #{visible_module_forward.1} parent=0
    _
  %s6 = ssub.s32 1, %s4
  %s7 = scalar_select 0, %s6, %s4
  loop: start=0, step=1, limit=4
  $region2: #{visible_module_forward.1} parent=0 // loop_pre_header
    _
  $region3: #{visible_module_forward.1} parent=0 // loop_header
    %s9 = sphi 0, %s13
    %p10 = scmp.ge.s32.totalorder %s9, 4
    %s19 = sphi 0, %s21
    %s22 = sphi 0, %s19
    %s23 = sphi 0, %s22
    %s39 = sphi 0, %s23
    %s43 = sphi 0, %s43
    %s45 = sphi 0, %s43
    %s46 = sphi 0, %s45
    %s60 = sphi 0, %s46
    %s64 = sphi 0, %s64
    %s66 = sphi 0, %s64
    %s67 = sphi 0, %s66
    %s81 = sphi 0, %s67
    %s87 = sphi 0, %s89
    %s90 = sphi 0, %s87
    %s91 = sphi 0, %s90
    %s107 = sphi 0, %s91
  $region4: #{visible_module_forward.1} parent=0 // loop_header_branch
    %12 = sbr.rel (%p10) target = $region8
  $region5: #{visible_module_forward.1} parent=0 // loop_body
    %s14 = ssub.s32 %s9, 1
    %s15 = ssub.s32 %s9, 2
    %s16 = sadd.s32 %s9, 1
    %s17 = ssub.s32 %s9, %s16
    %p18 = scmp.eq.s32.totalorder %s17, 0
    %s20 = sadd.s32 %s19, 1
    %s21 = scalar_select %p18, %s19, %s20
    %p24 = pneg %p18
    %p25 = scmp.eq.s32.totalorder %s9, 1
    %p26 = por %p24, %p25
    %p27 = scmp.ne.s32.totalorder %s19, %s22
    %p28 = scmp.eq.s32.totalorder %s9, 0
    %p29 = por %p27, %p28
    %p30 = scmp.ne.s32.totalorder %s19, %s22
    %p31 = scmp.eq.s32.totalorder %s14, 1
    %p32 = por %p30, %p31
    %p33 = scmp.ne.s32.totalorder %s22, %s23
    %p34 = scmp.eq.s32.totalorder %s14, 0
    %p35 = por %p33, %p34
    %p36 = scmp.ne.s32.totalorder %s22, %s23
    %p37 = scmp.eq.s32.totalorder %s15, 1
    %p38 = por %p36, %p37
    %p40 = scmp.ne.s32.totalorder %s23, %s39
    %p41 = scmp.eq.s32.totalorder %s15, 0
    %p42 = por %p40, %p41
    %s44 = sadd.s32 %s43, 1
    %p47 = scmp.eq.s32.totalorder %s9, 1
    %p48 = scmp.ne.s32.totalorder %s43, %s45
    %p49 = scmp.eq.s32.totalorder %s9, 0
    %p50 = por %p48, %p49
    %p51 = scmp.ne.s32.totalorder %s43, %s45
    %p52 = scmp.eq.s32.totalorder %s14, 1
    %p53 = por %p51, %p52
    %p54 = scmp.ne.s32.totalorder %s45, %s46
    %p55 = scmp.eq.s32.totalorder %s14, 0
    %p56 = por %p54, %p55
    %p57 = scmp.ne.s32.totalorder %s45, %s46
    %p58 = scmp.eq.s32.totalorder %s15, 1
    %p59 = por %p57, %p58
    %p61 = scmp.ne.s32.totalorder %s46, %s60
    %p62 = scmp.eq.s32.totalorder %s15, 0
    %p63 = por %p61, %p62
    %s65 = sadd.s32 %s64, 1
    %p68 = scmp.eq.s32.totalorder %s9, 1
    %p69 = scmp.ne.s32.totalorder %s64, %s66
    %p70 = scmp.eq.s32.totalorder %s9, 0
    %p71 = por %p69, %p70
    %p72 = scmp.ne.s32.totalorder %s64, %s66
    %p73 = scmp.eq.s32.totalorder %s14, 1
    %p74 = por %p72, %p73
    %p75 = scmp.ne.s32.totalorder %s66, %s67
    %p76 = scmp.eq.s32.totalorder %s14, 0
    %p77 = por %p75, %p76
    %p78 = scmp.ne.s32.totalorder %s66, %s67
    %p79 = scmp.eq.s32.totalorder %s15, 1
    %p80 = por %p78, %p79
    %p82 = scmp.ne.s32.totalorder %s67, %s81
    %p83 = scmp.eq.s32.totalorder %s15, 0
    %p84 = por %p82, %p83
    %s85 = ssub.s32 %s9, %s16
    %p86 = scmp.eq.s32.totalorder %s85, 0
    %s88 = sadd.s32 %s87, 1
    %s89 = scalar_select %p86, %s87, %s88
    %p92 = pneg %p86
    %p93 = scmp.eq.s32.totalorder %s9, 1
    %p94 = por %p92, %p93
    %p95 = scmp.ne.s32.totalorder %s87, %s90
    %p96 = scmp.eq.s32.totalorder %s9, 0
    %p97 = por %p95, %p96
    %p98 = scmp.ne.s32.totalorder %s87, %s90
    %p99 = scmp.eq.s32.totalorder %s14, 1
    %p100 = por %p98, %p99
    %p101 = scmp.ne.s32.totalorder %s90, %s91
    %p102 = scmp.eq.s32.totalorder %s14, 0
    %p103 = por %p101, %p102
    %p104 = scmp.ne.s32.totalorder %s90, %s91
    %p105 = scmp.eq.s32.totalorder %s15, 1
    %p106 = por %p104, %p105
    %p108 = scmp.ne.s32.totalorder %s91, %s107
    %p109 = scmp.eq.s32.totalorder %s15, 0
    %p110 = por %p108, %p109
    %p111 = scmp.le.s32.totalorder 1, %s9
    %p112 = scmp.lt.s32.totalorder %s9, 3
    %p113 = pnand %p111, %p112
    %p114 = pneg %p113
    // Predicated region
    $region9: #{visible_module_forward.1} parent=5 // pred_check
      _
    $region10: #{visible_module_forward.1} parent=5 // pred_check_branch
      %116 = sbr.rel (%p113) target = $region12
    $region11: #{visible_module_forward.1} parent=5 // pred_region
      %s117 = ssub.s32 %s9, 1
      // Predicated region
      $region13: #{visible_module_forward.1} parent=11 // pred_check
        %p118 = pneg %p56
      $region14: #{visible_module_forward.1} parent=11 // pred_check_branch
        %120 = sbr.rel (%p118) target = $region16
      $region15: #{visible_module_forward.1} parent=11 // pred_region
        _
      $region16: #{visible_module_forward.1} parent=11 // pred_fallthru
        _
      // Predicated region
      $region17: #{visible_module_forward.1} parent=11 // pred_check
        %p121 = pneg %p77
      $region18: #{visible_module_forward.1} parent=11 // pred_check_branch
        %123 = sbr.rel (%p121) target = $region20
      $region19: #{visible_module_forward.1} parent=11 // pred_region
        _
      $region20: #{visible_module_forward.1} parent=11 // pred_fallthru
        _
    $region12: #{visible_module_forward.1} parent=5 // pred_fallthru
      _
    %p124 = scmp.lt.s32.totalorder %s9, 2
    // Predicated region
    $region21: #{visible_module_forward.1} parent=5 // pred_check
      %p125 = pneg %p124
    $region22: #{visible_module_forward.1} parent=5 // pred_check_branch
      %127 = sbr.rel (%p125) target = $region24
    $region23: #{visible_module_forward.1} parent=5 // pred_region
      // Predicated region
      $region25: #{visible_module_forward.1} parent=23 // pred_check
        %p128 = pneg %p29
      $region26: #{visible_module_forward.1} parent=23 // pred_check_branch
        %130 = sbr.rel (%p128) target = $region28
      $region27: #{visible_module_forward.1} parent=23 // pred_region
        %p131 = scmp.lt.s32.totalorder %s9, 1
        %s132 = scalar_select %p131, %s9, 1
        %s133 = smul.addr %s132, 76
        %s134 = smul.addr %s133, 4
        %s135 = scalar_lea.vmem %s0, %s134
      $region28: #{visible_module_forward.1} parent=23 // pred_fallthru
        _
    $region24: #{visible_module_forward.1} parent=5 // pred_fallthru
      _
    %p136 = scmp.le.s32.totalorder 1, %s9
    %p137 = scmp.lt.s32.totalorder %s9, 3
    %p138 = pnand %p136, %p137
    %p139 = pneg %p138
    // Predicated region
    $region29: #{visible_module_forward.1} parent=5 // pred_check
      _
    $region30: #{visible_module_forward.1} parent=5 // pred_check_branch
      %141 = sbr.rel (%p138) target = $region32
    $region31: #{visible_module_forward.1} parent=5 // pred_region
      %s142 = ssub.s32 %s9, 1
      %p143 = scmp.lt.s32.totalorder %s14, 1
      %s144 = scalar_select %p143, %s14, 1
      %s145 = smul.addr %s144, 76
      %s146 = smul.addr %s145, 4
      %s147 = scalar_lea.vmem %s0, %s146
      %p148 = pneg %p35
      %p149 = pneg %p32
      %p150 = pneg %p56
      %p151 = pneg %p53
      %p152 = pneg %p77
      %p153 = pneg %p74
      %p154 = pneg %p103
      %p155 = pneg %p100
      %p156 = scmp.lt.s32.totalorder %s14, 1
      %s157 = scalar_select %p156, %s14, 1
      %s158 = smul.addr %s157, 8
      %s159 = smul.addr %s158, 8
      %s160 = scalar_lea.vmem %s3, %s159
      %p161 = scmp.lt.s32.totalorder %s14, 1
      %s162 = scalar_select %p161, %s14, 1
      %s163 = smul.addr %s162, 76
      %s164 = smul.addr %s163, 4
      %s165 = scalar_lea.vmem %s0, %s164
      %p166 = scmp.lt.s32.totalorder %s14, 1
      %s167 = scalar_select %p166, %s14, 1
      %s168 = smul.addr %s167, 8
      %s169 = smul.addr %s168, 8
      %s170 = scalar_lea.vmem %s3, %s169
      %v172 = vld [vmem:[%s1] sm:$0xff]
      %v173 = vld [vmem:[%s1 + $0x8] sm:$0xff]
      %v174 = vld [vmem:[%s1 + $0x10] sm:$0xff]
      %v175 = vld [vmem:[%s1 + $0x18] sm:$0xff]
      %v176 = vld [vmem:[%s1 + $0x20] sm:$0xff]
      %v177 = vld [vmem:[%s1 + $0x28] sm:$0xff]
      %v178 = vld [vmem:[%s1 + $0x30] sm:$0xff]
      %v179 = vld [vmem:[%s1 + $0x38] sm:$0xff]
      %v180 = vld [vmem:[%s2] sm:$0xff]
      %v181 = vld [vmem:[%s2 + $0x8] sm:$0xff]
      %v182 = vld [vmem:[%s2 + $0x10] sm:$0xff]
      %v183 = vld [vmem:[%s2 + $0x18] sm:$0xff]
      %v184 = vld [vmem:[%s2 + $0x20] sm:$0xff]
      %v185 = vld [vmem:[%s2 + $0x28] sm:$0xff]
      %v186 = vld [vmem:[%s2 + $0x30] sm:$0xff]
      %v187 = vld [vmem:[%s2 + $0x38] sm:$0xff]
      %v188 = vlaneseq
      %v189 = vand.u32 %v188, 127
      %vm190 = vcmp.lt.s32.totalorder %v189, 0
      %v191 = vsub.s32 0, %v189
      %v192 = vsel %vm190, %v191, %v189
      %v193 = vshrl.u32 %v192, 3
      %v194 = vand.u32 %v192, 7
      %v195 = vsub.s32 0, %v194
      %v196 = vsel %vm190, %v195, %v194
      %vm197 = vcmp.ne.s32.totalorder %v196, 0
      %vm198 = vcmp.lt.s32.totalorder %v196, 0
      %vm199 = vmand %vm198, %vm197
      %v200 = vadd.s32 %v196, 8
      %v201 = vsel %vm199, %v200, %v196
      %vm202 = vcmp.ne.s32.totalorder %v201, 0
      %vm203 = vcmp.ge.s32.totalorder %v189, 8
      %s204 = scalar_lea.vmem %s165, 76
      %v205 = vld [vmem:[%s204] sm:$0xf]
      %v206 = vld [vmem:[%s204 + $0x4] sm:$0xf]
      %v207 = vld [vmem:[%s204 + $0x8] sm:$0xf]
      %v208 = vld [vmem:[%s204 + $0xc] sm:$0xf]
      %v209 = vld [vmem:[%s204 + $0x10] sm:$0xf]
      %v210 = vld [vmem:[%s204 + $0x14] sm:$0xf]
      %v211 = vld [vmem:[%s204 + $0x18] sm:$0xf]
      %v212 = vld [vmem:[%s204 + $0x1c] sm:$0xf]
      %v213 = vld [vmem:[%s204 + $0x20] sm:$0xf]
      %v214 = vld [vmem:[%s204 + $0x24] sm:$0xf]
      %v215 = vld [vmem:[%s204 + $0x28] sm:$0xf]
      %v216 = vld [vmem:[%s204 + $0x2c] sm:$0xf]
      %v217 = vld [vmem:[%s204 + $0x30] sm:$0xf]
      %v218 = vld [vmem:[%s204 + $0x34] sm:$0xf]
      %v219 = vld [vmem:[%s204 + $0x38] sm:$0xf]
      %v220 = vld [vmem:[%s204 + $0x3c] sm:$0xf]
      %v221 = vld [vmem:[%s204 + $0x40] sm:$0xf]
      %v222 = vld [vmem:[%s204 + $0x44] sm:$0xf]
      %v223 = vld [vmem:[%s204 + $0x48] sm:$0x3]
      %225 = vset.pattern.permute.xlu0 0
      %226 = vperm.xlu0 %225, %v180
      %v227 = vpop.permute.xlu0 %226
      %230 = vset.pattern.permute.xlu0 0
      %231 = vperm.xlu0 %230, %v181
      %v232 = vpop.permute.xlu0 %231
      %235 = vset.pattern.permute.xlu0 0
      %236 = vperm.xlu0 %235, %v182
      %v237 = vpop.permute.xlu0 %236
      %240 = vset.pattern.permute.xlu0 0
      %241 = vperm.xlu0 %240, %v183
      %v242 = vpop.permute.xlu0 %241
      %245 = vset.pattern.permute.xlu0 0
      %246 = vperm.xlu0 %245, %v184
      %v247 = vpop.permute.xlu0 %246
      %250 = vset.pattern.permute.xlu0 0
      %251 = vperm.xlu0 %250, %v185
      %v252 = vpop.permute.xlu0 %251
      %255 = vset.pattern.permute.xlu0 0
      %256 = vperm.xlu0 %255, %v186
      %v257 = vpop.permute.xlu0 %256
      %260 = vset.pattern.permute.xlu0 0
      %261 = vperm.xlu0 %260, %v187
      %v262 = vpop.permute.xlu0 %261
      %v272 = vunpack.c.l.b16 %v172
      %v273 = vunpack.c.h.b16 %v172
      %v274 = vunpack.c.l.b16 %v173
      %v275 = vunpack.c.h.b16 %v173
      %v276 = vunpack.c.l.b16 %v174
      %v277 = vunpack.c.h.b16 %v174
      %v278 = vunpack.c.l.b16 %v175
      %v279 = vunpack.c.h.b16 %v175
      %v280 = vunpack.c.l.b16 %v176
      %v281 = vunpack.c.h.b16 %v176
      %v282 = vunpack.c.l.b16 %v177
      %v283 = vunpack.c.h.b16 %v177
      %v284 = vunpack.c.l.b16 %v178
      %v285 = vunpack.c.h.b16 %v178
      %v286 = vunpack.c.l.b16 %v179
      %v287 = vunpack.c.h.b16 %v179
      %v288 = vpack.c.b16 %v274, %v272
      %v289 = vpack.c.b16 %v275, %v273
      %v290 = vpack.c.b16 %v278, %v276
      %v291 = vpack.c.b16 %v279, %v277
      %v292 = vpack.c.b16 %v282, %v280
      %v293 = vpack.c.b16 %v283, %v281
      %v294 = vpack.c.b16 %v286, %v284
      %v295 = vpack.c.b16 %v287, %v285
      %v319 = vunpack.c.l.b16 %v205
      %v320 = vunpack.c.l.b16 %v206
      %v321 = vunpack.c.l.b16 %v207
      %v322 = vunpack.c.l.b16 %v208
      %v323 = vunpack.c.l.b16 %v209
      %v324 = vunpack.c.l.b16 %v210
      %v325 = vunpack.c.l.b16 %v211
      %v326 = vunpack.c.l.b16 %v212
      %v327 = vunpack.c.l.b16 %v213
      %v328 = vunpack.c.l.b16 %v214
      %v329 = vunpack.c.l.b16 %v215
      %v330 = vunpack.c.l.b16 %v216
      %v331 = vunpack.c.l.b16 %v217
      %v332 = vunpack.c.l.b16 %v218
      %v333 = vunpack.c.l.b16 %v219
      %v334 = vunpack.c.l.b16 %v220
      %v335 = vunpack.c.l.b16 %v221
      %v336 = vunpack.c.l.b16 %v222
      %v337 = vunpack.c.l.b16 %v223
      %v338 = vpack.c.b16 %v320, %v319
      %v339 = vpack.c.b16 %v322, %v321
      %v340 = vpack.c.b16 %v324, %v323
      %v341 = vpack.c.b16 %v326, %v325
      %v342 = vpack.c.b16 %v328, %v327
      %v343 = vpack.c.b16 %v330, %v329
      %v344 = vpack.c.b16 %v332, %v331
      %v345 = vpack.c.b16 %v334, %v333
      %v346 = vpack.c.b16 %v336, %v335
      %v347 = vpack.c.b16 %v337, %v337
      %vm357 = vcmask 154624
      %v359 = vsel %vm357, %v289, 0
      %v362 = vsel %vm357, %v291, 0
      %v365 = vsel %vm357, %v293, 0
      %v368 = vsel %vm357, %v295, 0
      %vm370 = vcmask 1040384
      %vm371 = vcmask 1041408
      %v372 = vsel %vm370, 4294967295, 65535
      %v373 = vsel %vm371, %v372, 0
      %v375 = vand.u32 %v347, %v373
      %377 = vmatprep.subr.bf16.mxu0 0
      %378 = vmatpush1.bf16.msra.mxu0 %v338
      %379 = vmatprep.subr.bf16.mxu0 0
      %380 = vmatpush1.bf16.msra.mxu0 %v339
      %381 = vmatprep.subr.bf16.mxu0 0
      %382 = vmatpush1.bf16.msra.mxu0 %v340
      %383 = vmatprep.subr.bf16.mxu0 0
      %384 = vmatpush1.bf16.msra.mxu0 %v341
      %385 = vmatprep.subr.bf16.mxu0 0
      %386 = vmatpush1.bf16.msra.mxu0 %v342
      %387 = vmatprep.subr.bf16.mxu0 0
      %388 = vmatpush1.bf16.msra.mxu0 %v343
      %389 = vmatprep.subr.bf16.mxu0 0
      %390 = vmatpush1.bf16.msra.mxu0 %v344
      %391 = vmatprep.subr.bf16.mxu0 0
      %392 = vmatpush1.bf16.msra.mxu0 %v345
      %393 = vmatprep.subr.bf16.mxu0 0
      %394 = vmatpush1.bf16.msra.mxu0 %v346
      %395 = vmatprep.subr.bf16.mxu0 0
      %396 = vmatpush1.bf16.msra.mxu0 %v375
      %397 = vmatprep.subr.bf16.mxu0 0
      %398 = vmatpush1.bf16.msra.mxu0 0
      %399 = vmatprep.subr.bf16.mxu0 0
      %400 = vmatpush1.bf16.msra.mxu0 0
      %401 = vmatprep.subr.bf16.mxu0 0
      %402 = vmatpush1.bf16.msra.mxu0 0
      %403 = vmatprep.subr.bf16.mxu0 0
      %404 = vmatpush1.bf16.msra.mxu0 0
      %405 = vmatprep.subr.bf16.mxu0 0
      %406 = vmatpush1.bf16.msra.mxu0 0
      %407 = vmatprep.subr.bf16.mxu0 0
      %408 = vmatpush1.bf16.msra.mxu0 0
      %409 = vmatprep.mubr.bf16.mxu0 %v359
      %410 = vmatmul.mubr.bf16.gmra.mrb[0].mxu0 %v288
      %v411 = vpop.f32.mrb[0].mxu0
      %v412 = vadd.f32 %v227, %v411
      %v413 = vpop.f32.mrb[0].mxu0
      %v414 = vpop.f32.mrb[0].mxu0
      %v415 = vadd.f32 %v232, %v414
      %v416 = vpop.f32.mrb[0].mxu0
      %417 = vmatprep.mubr.bf16.mxu0 %v362
      %418 = vmatmul.mubr.bf16.gmra.mrb[0].mxu0 %v290
      %v419 = vpop.f32.mrb[0].mxu0
      %v420 = vadd.f32 %v237, %v419
      %v421 = vpop.f32.mrb[0].mxu0
      %v422 = vpop.f32.mrb[0].mxu0
      %v423 = vadd.f32 %v242, %v422
      %v424 = vpop.f32.mrb[0].mxu0
      %425 = vmatprep.mubr.bf16.mxu0 %v365
      %426 = vmatmul.mubr.bf16.gmra.mrb[0].mxu0 %v292
      %v427 = vpop.f32.mrb[0].mxu0
      %v428 = vadd.f32 %v247, %v427
      %v429 = vpop.f32.mrb[0].mxu0
      %v430 = vpop.f32.mrb[0].mxu0
      %v431 = vadd.f32 %v252, %v430
      %v432 = vpop.f32.mrb[0].mxu0
      %433 = vmatprep.mubr.bf16.mxu0 %v368
      %434 = vmatmul.mubr.bf16.gmra.mrb[0].mxu0 %v294
      %v435 = vpop.f32.mrb[0].mxu0
      %v436 = vadd.f32 %v257, %v435
      %v437 = vpop.f32.mrb[0].mxu0
      %v438 = vpop.f32.mrb[0].mxu0
      %v439 = vadd.f32 %v262, %v438
      %v440 = vpop.f32.mrb[0].mxu0
      %441 = vdwg.mxu0
      %v442 = vmax.f32 %v412, 0.0
      %v443 = vmax.f32 %v415, 0.0
      %v444 = vmax.f32 %v420, 0.0
      %v445 = vmax.f32 %v423, 0.0
      %v446 = vmax.f32 %v428, 0.0
      %v447 = vmax.f32 %v431, 0.0
      %v448 = vmax.f32 %v436, 0.0
      %v449 = vmax.f32 %v439, 0.0
      %v450 = vld [vmem:[%s165] sm:$0xf]
      %v451 = vld [vmem:[%s165 + $0x4] sm:$0xf]
      %v452 = vld [vmem:[%s165 + $0x8] sm:$0xf]
      %v453 = vld [vmem:[%s165 + $0xc] sm:$0xf]
      %v454 = vld [vmem:[%s165 + $0x10] sm:$0xf]
      %v455 = vld [vmem:[%s165 + $0x14] sm:$0xf]
      %v456 = vld [vmem:[%s165 + $0x18] sm:$0xf]
      %v457 = vld [vmem:[%s165 + $0x1c] sm:$0xf]
      %v458 = vld [vmem:[%s165 + $0x20] sm:$0xf]
      %v459 = vld [vmem:[%s165 + $0x24] sm:$0xf]
      %v460 = vld [vmem:[%s165 + $0x28] sm:$0xf]
      %v461 = vld [vmem:[%s165 + $0x2c] sm:$0xf]
      %v462 = vld [vmem:[%s165 + $0x30] sm:$0xf]
      %v463 = vld [vmem:[%s165 + $0x34] sm:$0xf]
      %v464 = vld [vmem:[%s165 + $0x38] sm:$0xf]
      %v465 = vld [vmem:[%s165 + $0x3c] sm:$0xf]
      %v466 = vld [vmem:[%s165 + $0x40] sm:$0xf]
      %v467 = vld [vmem:[%s165 + $0x44] sm:$0xf]
      %v468 = vld [vmem:[%s165 + $0x48] sm:$0x3]
      %v488 = vunpack.c.l.b16 %v450
      %v489 = vunpack.c.l.b16 %v451
      %v490 = vunpack.c.l.b16 %v452
      %v491 = vunpack.c.l.b16 %v453
      %v492 = vunpack.c.l.b16 %v454
      %v493 = vunpack.c.l.b16 %v455
      %v494 = vunpack.c.l.b16 %v456
      %v495 = vunpack.c.l.b16 %v457
      %v496 = vunpack.c.l.b16 %v458
      %v497 = vunpack.c.l.b16 %v459
      %v498 = vunpack.c.l.b16 %v460
      %v499 = vunpack.c.l.b16 %v461
      %v500 = vunpack.c.l.b16 %v462
      %v501 = vunpack.c.l.b16 %v463
      %v502 = vunpack.c.l.b16 %v464
      %v503 = vunpack.c.l.b16 %v465
      %v504 = vunpack.c.l.b16 %v466
      %v505 = vunpack.c.l.b16 %v467
      %v506 = vunpack.c.l.b16 %v468
      %v507 = vpack.c.b16 %v489, %v488
      %v508 = vpack.c.b16 %v491, %v490
      %v509 = vpack.c.b16 %v493, %v492
      %v510 = vpack.c.b16 %v495, %v494
      %v511 = vpack.c.b16 %v497, %v496
      %v512 = vpack.c.b16 %v499, %v498
      %v513 = vpack.c.b16 %v501, %v500
      %v514 = vpack.c.b16 %v503, %v502
      %v515 = vpack.c.b16 %v505, %v504
      %v516 = vpack.c.b16 %v506, %v506
      %v527 = vand.u32 %v516, %v373
      %529 = vmatprep.subr.bf16.mxu0 0
      %530 = vmatpush1.bf16.msra.mxu0 %v507
      %531 = vmatprep.subr.bf16.mxu0 0
      %532 = vmatpush1.bf16.msra.mxu0 %v508
      %533 = vmatprep.subr.bf16.mxu0 0
      %534 = vmatpush1.bf16.msra.mxu0 %v509
      %535 = vmatprep.subr.bf16.mxu0 0
      %536 = vmatpush1.bf16.msra.mxu0 %v510
      %537 = vmatprep.subr.bf16.mxu0 0
      %538 = vmatpush1.bf16.msra.mxu0 %v511
      %539 = vmatprep.subr.bf16.mxu0 0
      %540 = vmatpush1.bf16.msra.mxu0 %v512
      %541 = vmatprep.subr.bf16.mxu0 0
      %542 = vmatpush1.bf16.msra.mxu0 %v513
      %543 = vmatprep.subr.bf16.mxu0 0
      %544 = vmatpush1.bf16.msra.mxu0 %v514
      %545 = vmatprep.subr.bf16.mxu0 0
      %546 = vmatpush1.bf16.msra.mxu0 %v515
      %547 = vmatprep.subr.bf16.mxu0 0
      %548 = vmatpush1.bf16.msra.mxu0 %v527
      %549 = vmatprep.subr.bf16.mxu0 0
      %550 = vmatpush1.bf16.msra.mxu0 0
      %551 = vmatprep.subr.bf16.mxu0 0
      %552 = vmatpush1.bf16.msra.mxu0 0
      %553 = vmatprep.subr.bf16.mxu0 0
      %554 = vmatpush1.bf16.msra.mxu0 0
      %555 = vmatprep.subr.bf16.mxu0 0
      %556 = vmatpush1.bf16.msra.mxu0 0
      %557 = vmatprep.subr.bf16.mxu0 0
      %558 = vmatpush1.bf16.msra.mxu0 0
      %559 = vmatprep.subr.bf16.mxu0 0
      %560 = vmatpush1.bf16.msra.mxu0 0
      %561 = vmatprep.mubr.bf16.mxu0 %v359
      %562 = vmatmul.mubr.bf16.gmra.mrb[0].mxu0 %v288
      %v563 = vpop.f32.mrb[0].mxu0
      %v564 = vadd.f32 %v227, %v563
      %v565 = vpop.f32.mrb[0].mxu0
      %v566 = vpop.f32.mrb[0].mxu0
      %v567 = vadd.f32 %v232, %v566
      %v568 = vpop.f32.mrb[0].mxu0
      %569 = vmatprep.mubr.bf16.mxu0 %v362
      %570 = vmatmul.mubr.bf16.gmra.mrb[0].mxu0 %v290
      %v571 = vpop.f32.mrb[0].mxu0
      %v572 = vadd.f32 %v237, %v571
      %v573 = vpop.f32.mrb[0].mxu0
      %v574 = vpop.f32.mrb[0].mxu0
      %v575 = vadd.f32 %v242, %v574
      %v576 = vpop.f32.mrb[0].mxu0
      %577 = vmatprep.mubr.bf16.mxu0 %v365
      %578 = vmatmul.mubr.bf16.gmra.mrb[0].mxu0 %v292
      %v579 = vpop.f32.mrb[0].mxu0
      %v580 = vadd.f32 %v247, %v579
      %v581 = vpop.f32.mrb[0].mxu0
      %v582 = vpop.f32.mrb[0].mxu0
      %v583 = vadd.f32 %v252, %v582
      %v584 = vpop.f32.mrb[0].mxu0
      %585 = vmatprep.mubr.bf16.mxu0 %v368
      %586 = vmatmul.mubr.bf16.gmra.mrb[0].mxu0 %v294
      %v587 = vpop.f32.mrb[0].mxu0
      %v588 = vadd.f32 %v257, %v587
      %v589 = vpop.f32.mrb[0].mxu0
      %v590 = vpop.f32.mrb[0].mxu0
      %v591 = vadd.f32 %v262, %v590
      %v592 = vpop.f32.mrb[0].mxu0
      %593 = vdwg.mxu0
      %v594 = vmax.f32 %v564, 0.0
      %v595 = vmax.f32 %v567, 0.0
      %v596 = vmax.f32 %v572, 0.0
      %v597 = vmax.f32 %v575, 0.0
      %v598 = vmax.f32 %v580, 0.0
      %v599 = vmax.f32 %v583, 0.0
      %v600 = vmax.f32 %v588, 0.0
      %v601 = vmax.f32 %v591, 0.0
      %v602 = vmax.f32 %v594, %v442
      %v603 = vmax.f32 %v595, %v443
      %v604 = vmax.f32 %v596, %v444
      %v605 = vmax.f32 %v597, %v445
      %v606 = vmax.f32 %v598, %v446
      %v607 = vmax.f32 %v599, %v447
      %v608 = vmax.f32 %v600, %v448
      %v609 = vmax.f32 %v601, %v449
      %vm610 = vcmask 1048064
      %611 = vrot.lane.b32.xlu0 %v442, 64
      %v612 = vpop.permute.xlu0 %611
      %v613 = vsel %vm610, %v612, %v442
      %614 = vrot.lane.b32.xlu0 %v443, 64
      %v615 = vpop.permute.xlu0 %614
      %v616 = vsel %vm610, %v615, %v443
      %617 = vrot.lane.b32.xlu0 %v444, 64
      %v618 = vpop.permute.xlu0 %617
      %v619 = vsel %vm610, %v618, %v444
      %620 = vrot.lane.b32.xlu0 %v445, 64
      %v621 = vpop.permute.xlu0 %620
      %v622 = vsel %vm610, %v621, %v445
      %623 = vrot.lane.b32.xlu0 %v446, 64
      %v624 = vpop.permute.xlu0 %623
      %v625 = vsel %vm610, %v624, %v446
      %626 = vrot.lane.b32.xlu0 %v447, 64
      %v627 = vpop.permute.xlu0 %626
      %v628 = vsel %vm610, %v627, %v447
      %629 = vrot.lane.b32.xlu0 %v448, 64
      %v630 = vpop.permute.xlu0 %629
      %v631 = vsel %vm610, %v630, %v448
      %632 = vrot.lane.b32.xlu0 %v449, 64
      %v633 = vpop.permute.xlu0 %632
      %v634 = vsel %vm610, %v633, %v449
      %635 = vrot.lane.b32.xlu0 %v613, 64
      %v636 = vpop.permute.xlu0 %635
      %637 = vrot.lane.b32.xlu0 %v616, 64
      %v638 = vpop.permute.xlu0 %637
      %639 = vrot.lane.b32.xlu0 %v619, 64
      %v640 = vpop.permute.xlu0 %639
      %641 = vrot.lane.b32.xlu0 %v622, 64
      %v642 = vpop.permute.xlu0 %641
      %643 = vrot.lane.b32.xlu0 %v625, 64
      %v644 = vpop.permute.xlu0 %643
      %645 = vrot.lane.b32.xlu0 %v628, 64
      %v646 = vpop.permute.xlu0 %645
      %647 = vrot.lane.b32.xlu0 %v631, 64
      %v648 = vpop.permute.xlu0 %647
      %649 = vrot.lane.b32.xlu0 %v634, 64
      %v650 = vpop.permute.xlu0 %649
      %v651 = vsel %vm610, %v636, %v442
      %v652 = vsel %vm610, %v638, %v443
      %v653 = vsel %vm610, %v640, %v444
      %v654 = vsel %vm610, %v642, %v445
      %v655 = vsel %vm610, %v644, %v446
      %v656 = vsel %vm610, %v646, %v447
      %v657 = vsel %vm610, %v648, %v448
      %v658 = vsel %vm610, %v650, %v449
      %v659 = vsel %vm202, 1, 0
      %vm660 = vcmp.eq.s32.totalorder %v659, 1
      %669 = vrot.lane.b32.xlu0 %v651, 65
      %v670 = vpop.permute.xlu0 %669
      %671 = vrot.lane.b32.xlu0 %v652, 65
      %v672 = vpop.permute.xlu0 %671
      %673 = vrot.lane.b32.xlu0 %v653, 65
      %v674 = vpop.permute.xlu0 %673
      %675 = vrot.lane.b32.xlu0 %v654, 65
      %v676 = vpop.permute.xlu0 %675
      %677 = vrot.lane.b32.xlu0 %v655, 65
      %v678 = vpop.permute.xlu0 %677
      %679 = vrot.lane.b32.xlu0 %v656, 65
      %v680 = vpop.permute.xlu0 %679
      %681 = vrot.lane.b32.xlu0 %v657, 65
      %v682 = vpop.permute.xlu0 %681
      %683 = vrot.lane.b32.xlu0 %v658, 65
      %v684 = vpop.permute.xlu0 %683
      %v693 = vsel %vm660, %v670, 0.0
      %v694 = vsel %vm660, %v672, 0.0
      %v695 = vsel %vm660, %v674, 0.0
      %v696 = vsel %vm660, %v676, 0.0
      %v697 = vsel %vm660, %v678, 0.0
      %v698 = vsel %vm660, %v680, 0.0
      %v699 = vsel %vm660, %v682, 0.0
      %v700 = vsel %vm660, %v684, 0.0
      %v701 = vmax.f32 %v602, %v693
      %v702 = vmax.f32 %v603, %v694
      %v703 = vmax.f32 %v604, %v695
      %v704 = vmax.f32 %v605, %v696
      %v705 = vmax.f32 %v606, %v697
      %v706 = vmax.f32 %v607, %v698
      %v707 = vmax.f32 %v608, %v699
      %v708 = vmax.f32 %v609, %v700
      %s709 = scalar_lea.vmem %s165, 228
      %v710 = vld [vmem:[%s709] sm:$0xf]
      %v711 = vld [vmem:[%s709 + $0x4] sm:$0xf]
      %v712 = vld [vmem:[%s709 + $0x8] sm:$0xf]
      %v713 = vld [vmem:[%s709 + $0xc] sm:$0xf]
      %v714 = vld [vmem:[%s709 + $0x10] sm:$0xf]
      %v715 = vld [vmem:[%s709 + $0x14] sm:$0xf]
      %v716 = vld [vmem:[%s709 + $0x18] sm:$0xf]
      %v717 = vld [vmem:[%s709 + $0x1c] sm:$0xf]
      %v718 = vld [vmem:[%s709 + $0x20] sm:$0xf]
      %v719 = vld [vmem:[%s709 + $0x24] sm:$0xf]
      %v720 = vld [vmem:[%s709 + $0x28] sm:$0xf]
      %v721 = vld [vmem:[%s709 + $0x2c] sm:$0xf]
      %v722 = vld [vmem:[%s709 + $0x30] sm:$0xf]
      %v723 = vld [vmem:[%s709 + $0x34] sm:$0xf]
      %v724 = vld [vmem:[%s709 + $0x38] sm:$0xf]
      %v725 = vld [vmem:[%s709 + $0x3c] sm:$0xf]
      %v726 = vld [vmem:[%s709 + $0x40] sm:$0xf]
      %v727 = vld [vmem:[%s709 + $0x44] sm:$0xf]
      %v728 = vld [vmem:[%s709 + $0x48] sm:$0x3]
      %v748 = vunpack.c.l.b16 %v710
      %v749 = vunpack.c.l.b16 %v711
      %v750 = vunpack.c.l.b16 %v712
      %v751 = vunpack.c.l.b16 %v713
      %v752 = vunpack.c.l.b16 %v714
      %v753 = vunpack.c.l.b16 %v715
      %v754 = vunpack.c.l.b16 %v716
      %v755 = vunpack.c.l.b16 %v717
      %v756 = vunpack.c.l.b16 %v718
      %v757 = vunpack.c.l.b16 %v719
      %v758 = vunpack.c.l.b16 %v720
      %v759 = vunpack.c.l.b16 %v721
      %v760 = vunpack.c.l.b16 %v722
      %v761 = vunpack.c.l.b16 %v723
      %v762 = vunpack.c.l.b16 %v724
      %v763 = vunpack.c.l.b16 %v725
      %v764 = vunpack.c.l.b16 %v726
      %v765 = vunpack.c.l.b16 %v727
      %v766 = vunpack.c.l.b16 %v728
      %v767 = vpack.c.b16 %v749, %v748
      %v768 = vpack.c.b16 %v751, %v750
      %v769 = vpack.c.b16 %v753, %v752
      %v770 = vpack.c.b16 %v755, %v754
      %v771 = vpack.c.b16 %v757, %v756
      %v772 = vpack.c.b16 %v759, %v758
      %v773 = vpack.c.b16 %v761, %v760
      %v774 = vpack.c.b16 %v763, %v762
      %v775 = vpack.c.b16 %v765, %v764
      %v776 = vpack.c.b16 %v766, %v766
      %v787 = vand.u32 %v776, %v373
      %789 = vmatprep.subr.bf16.mxu0 0
      %790 = vmatpush1.bf16.msra.mxu0 %v767
      %791 = vmatprep.subr.bf16.mxu0 0
      %792 = vmatpush1.bf16.msra.mxu0 %v768
      %793 = vmatprep.subr.bf16.mxu0 0
      %794 = vmatpush1.bf16.msra.mxu0 %v769
      %795 = vmatprep.subr.bf16.mxu0 0
      %796 = vmatpush1.bf16.msra.mxu0 %v770
      %797 = vmatprep.subr.bf16.mxu0 0
      %798 = vmatpush1.bf16.msra.mxu0 %v771
      %799 = vmatprep.subr.bf16.mxu0 0
      %800 = vmatpush1.bf16.msra.mxu0 %v772
      %801 = vmatprep.subr.bf16.mxu0 0
      %802 = vmatpush1.bf16.msra.mxu0 %v773
      %803 = vmatprep.subr.bf16.mxu0 0
      %804 = vmatpush1.bf16.msra.mxu0 %v774
      %805 = vmatprep.subr.bf16.mxu0 0
      %806 = vmatpush1.bf16.msra.mxu0 %v775
      %807 = vmatprep.subr.bf16.mxu0 0
      %808 = vmatpush1.bf16.msra.mxu0 %v787
      %809 = vmatprep.subr.bf16.mxu0 0
      %810 = vmatpush1.bf16.msra.mxu0 0
      %811 = vmatprep.subr.bf16.mxu0 0
      %812 = vmatpush1.bf16.msra.mxu0 0
      %813 = vmatprep.subr.bf16.mxu0 0
      %814 = vmatpush1.bf16.msra.mxu0 0
      %815 = vmatprep.subr.bf16.mxu0 0
      %816 = vmatpush1.bf16.msra.mxu0 0
      %817 = vmatprep.subr.bf16.mxu0 0
      %818 = vmatpush1.bf16.msra.mxu0 0
      %819 = vmatprep.subr.bf16.mxu0 0
      %820 = vmatpush1.bf16.msra.mxu0 0
      %821 = vmatprep.mubr.bf16.mxu0 %v359
      %822 = vmatmul.mubr.bf16.gmra.mrb[0].mxu0 %v288
      %v823 = vpop.f32.mrb[0].mxu0
      %v824 = vadd.f32 %v227, %v823
      %v825 = vpop.f32.mrb[0].mxu0
      %v826 = vpop.f32.mrb[0].mxu0
      %v827 = vadd.f32 %v232, %v826
      %v828 = vpop.f32.mrb[0].mxu0
      %829 = vmatprep.mubr.bf16.mxu0 %v362
      %830 = vmatmul.mubr.bf16.gmra.mrb[0].mxu0 %v290
      %v831 = vpop.f32.mrb[0].mxu0
      %v832 = vadd.f32 %v237, %v831
      %v833 = vpop.f32.mrb[0].mxu0
      %v834 = vpop.f32.mrb[0].mxu0
      %v835 = vadd.f32 %v242, %v834
      %v836 = vpop.f32.mrb[0].mxu0
      %837 = vmatprep.mubr.bf16.mxu0 %v365
      %838 = vmatmul.mubr.bf16.gmra.mrb[0].mxu0 %v292
      %v839 = vpop.f32.mrb[0].mxu0
      %v840 = vadd.f32 %v247, %v839
      %v841 = vpop.f32.mrb[0].mxu0
      %v842 = vpop.f32.mrb[0].mxu0
      %v843 = vadd.f32 %v252, %v842
      %v844 = vpop.f32.mrb[0].mxu0
      %845 = vmatprep.mubr.bf16.mxu0 %v368
      %846 = vmatmul.mubr.bf16.gmra.mrb[0].mxu0 %v294
      %v847 = vpop.f32.mrb[0].mxu0
      %v848 = vadd.f32 %v257, %v847
      %v849 = vpop.f32.mrb[0].mxu0
      %v850 = vpop.f32.mrb[0].mxu0
      %v851 = vadd.f32 %v262, %v850
      %v852 = vpop.f32.mrb[0].mxu0
      %853 = vdwg.mxu0
      %v854 = vmax.f32 %v824, 0.0
      %v855 = vmax.f32 %v827, 0.0
      %v856 = vmax.f32 %v832, 0.0
      %v857 = vmax.f32 %v835, 0.0
      %v858 = vmax.f32 %v840, 0.0
      %v859 = vmax.f32 %v843, 0.0
      %v860 = vmax.f32 %v848, 0.0
      %v861 = vmax.f32 %v851, 0.0
      %s862 = scalar_lea.vmem %s165, 152
      %v863 = vld [vmem:[%s862] sm:$0xf]
      %v864 = vld [vmem:[%s862 + $0x4] sm:$0xf]
      %v865 = vld [vmem:[%s862 + $0x8] sm:$0xf]
      %v866 = vld [vmem:[%s862 + $0xc] sm:$0xf]
      %v867 = vld [vmem:[%s862 + $0x10] sm:$0xf]
      %v868 = vld [vmem:[%s862 + $0x14] sm:$0xf]
      %v869 = vld [vmem:[%s862 + $0x18] sm:$0xf]
      %v870 = vld [vmem:[%s862 + $0x1c] sm:$0xf]
      %v871 = vld [vmem:[%s862 + $0x20] sm:$0xf]
      %v872 = vld [vmem:[%s862 + $0x24] sm:$0xf]
      %v873 = vld [vmem:[%s862 + $0x28] sm:$0xf]
      %v874 = vld [vmem:[%s862 + $0x2c] sm:$0xf]
      %v875 = vld [vmem:[%s862 + $0x30] sm:$0xf]
      %v876 = vld [vmem:[%s862 + $0x34] sm:$0xf]
      %v877 = vld [vmem:[%s862 + $0x38] sm:$0xf]
      %v878 = vld [vmem:[%s862 + $0x3c] sm:$0xf]
      %v879 = vld [vmem:[%s862 + $0x40] sm:$0xf]
      %v880 = vld [vmem:[%s862 + $0x44] sm:$0xf]
      %v881 = vld [vmem:[%s862 + $0x48] sm:$0x3]
      %v901 = vunpack.c.l.b16 %v863
      %v902 = vunpack.c.l.b16 %v864
      %v903 = vunpack.c.l.b16 %v865
      %v904 = vunpack.c.l.b16 %v866
      %v905 = vunpack.c.l.b16 %v867
      %v906 = vunpack.c.l.b16 %v868
      %v907 = vunpack.c.l.b16 %v869
      %v908 = vunpack.c.l.b16 %v870
      %v909 = vunpack.c.l.b16 %v871
      %v910 = vunpack.c.l.b16 %v872
      %v911 = vunpack.c.l.b16 %v873
      %v912 = vunpack.c.l.b16 %v874
      %v913 = vunpack.c.l.b16 %v875
      %v914 = vunpack.c.l.b16 %v876
      %v915 = vunpack.c.l.b16 %v877
      %v916 = vunpack.c.l.b16 %v878
      %v917 = vunpack.c.l.b16 %v879
      %v918 = vunpack.c.l.b16 %v880
      %v919 = vunpack.c.l.b16 %v881
      %v920 = vpack.c.b16 %v902, %v901
      %v921 = vpack.c.b16 %v904, %v903
      %v922 = vpack.c.b16 %v906, %v905
      %v923 = vpack.c.b16 %v908, %v907
      %v924 = vpack.c.b16 %v910, %v909
      %v925 = vpack.c.b16 %v912, %v911
      %v926 = vpack.c.b16 %v914, %v913
      %v927 = vpack.c.b16 %v916, %v915
      %v928 = vpack.c.b16 %v918, %v917
      %v929 = vpack.c.b16 %v919, %v919
      %v940 = vand.u32 %v929, %v373
      %942 = vmatprep.subr.bf16.mxu0 0
      %943 = vmatpush1.bf16.msra.mxu0 %v920
      %944 = vmatprep.subr.bf16.mxu0 0
      %945 = vmatpush1.bf16.msra.mxu0 %v921
      %946 = vmatprep.subr.bf16.mxu0 0
      %947 = vmatpush1.bf16.msra.mxu0 %v922
      %948 = vmatprep.subr.bf16.mxu0 0
      %949 = vmatpush1.bf16.msra.mxu0 %v923
      %950 = vmatprep.subr.bf16.mxu0 0
      %951 = vmatpush1.bf16.msra.mxu0 %v924
      %952 = vmatprep.subr.bf16.mxu0 0
      %953 = vmatpush1.bf16.msra.mxu0 %v925
      %954 = vmatprep.subr.bf16.mxu0 0
      %955 = vmatpush1.bf16.msra.mxu0 %v926
      %956 = vmatprep.subr.bf16.mxu0 0
      %957 = vmatpush1.bf16.msra.mxu0 %v927
      %958 = vmatprep.subr.bf16.mxu0 0
      %959 = vmatpush1.bf16.msra.mxu0 %v928
      %960 = vmatprep.subr.bf16.mxu0 0
      %961 = vmatpush1.bf16.msra.mxu0 %v940
      %962 = vmatprep.subr.bf16.mxu0 0
      %963 = vmatpush1.bf16.msra.mxu0 0
      %964 = vmatprep.subr.bf16.mxu0 0
      %965 = vmatpush1.bf16.msra.mxu0 0
      %966 = vmatprep.subr.bf16.mxu0 0
      %967 = vmatpush1.bf16.msra.mxu0 0
      %968 = vmatprep.subr.bf16.mxu0 0
      %969 = vmatpush1.bf16.msra.mxu0 0
      %970 = vmatprep.subr.bf16.mxu0 0
      %971 = vmatpush1.bf16.msra.mxu0 0
      %972 = vmatprep.subr.bf16.mxu0 0
      %973 = vmatpush1.bf16.msra.mxu0 0
      %974 = vmatprep.mubr.bf16.mxu0 %v359
      %975 = vmatmul.mubr.bf16.gmra.mrb[0].mxu0 %v288
      %v976 = vpop.f32.mrb[0].mxu0
      %v977 = vadd.f32 %v227, %v976
      %v978 = vpop.f32.mrb[0].mxu0
      %v979 = vpop.f32.mrb[0].mxu0
      %v980 = vadd.f32 %v232, %v979
      %v981 = vpop.f32.mrb[0].mxu0
      %982 = vmatprep.mubr.bf16.mxu0 %v362
      %983 = vmatmul.mubr.bf16.gmra.mrb[0].mxu0 %v290
      %v984 = vpop.f32.mrb[0].mxu0
      %v985 = vadd.f32 %v237, %v984
      %v986 = vpop.f32.mrb[0].mxu0
      %v987 = vpop.f32.mrb[0].mxu0
      %v988 = vadd.f32 %v242, %v987
      %v989 = vpop.f32.mrb[0].mxu0
      %990 = vmatprep.mubr.bf16.mxu0 %v365
      %991 = vmatmul.mubr.bf16.gmra.mrb[0].mxu0 %v292
      %v992 = vpop.f32.mrb[0].mxu0
      %v993 = vadd.f32 %v247, %v992
      %v994 = vpop.f32.mrb[0].mxu0
      %v995 = vpop.f32.mrb[0].mxu0
      %v996 = vadd.f32 %v252, %v995
      %v997 = vpop.f32.mrb[0].mxu0
      %998 = vmatprep.mubr.bf16.mxu0 %v368
      %999 = vmatmul.mubr.bf16.gmra.mrb[0].mxu0 %v294
      %v1000 = vpop.f32.mrb[0].mxu0
      %v1001 = vadd.f32 %v257, %v1000
      %v1002 = vpop.f32.mrb[0].mxu0
      %v1003 = vpop.f32.mrb[0].mxu0
      %v1004 = vadd.f32 %v262, %v1003
      %v1005 = vpop.f32.mrb[0].mxu0
      %1006 = vdwg.mxu0
      %v1007 = vmax.f32 %v977, 0.0
      %v1008 = vmax.f32 %v980, 0.0
      %v1009 = vmax.f32 %v985, 0.0
      %v1010 = vmax.f32 %v988, 0.0
      %v1011 = vmax.f32 %v993, 0.0
      %v1012 = vmax.f32 %v996, 0.0
      %v1013 = vmax.f32 %v1001, 0.0
      %v1014 = vmax.f32 %v1004, 0.0
      %v1015 = vmax.f32 %v1007, %v854
      %v1016 = vmax.f32 %v1008, %v855
      %v1017 = vmax.f32 %v1009, %v856
      %v1018 = vmax.f32 %v1010, %v857
      %v1019 = vmax.f32 %v1011, %v858
      %v1020 = vmax.f32 %v1012, %v859
      %v1021 = vmax.f32 %v1013, %v860
      %v1022 = vmax.f32 %v1014, %v861
      %1023 = vrot.lane.b32.xlu0 %v854, 64
      %v1024 = vpop.permute.xlu0 %1023
      %v1025 = vsel %vm610, %v1024, %v854
      %1026 = vrot.lane.b32.xlu0 %v855, 64
      %v1027 = vpop.permute.xlu0 %1026
      %v1028 = vsel %vm610, %v1027, %v855
      %1029 = vrot.lane.b32.xlu0 %v856, 64
      %v1030 = vpop.permute.xlu0 %1029
      %v1031 = vsel %vm610, %v1030, %v856
      %1032 = vrot.lane.b32.xlu0 %v857, 64
      %v1033 = vpop.permute.xlu0 %1032
      %v1034 = vsel %vm610, %v1033, %v857
      %1035 = vrot.lane.b32.xlu0 %v858, 64
      %v1036 = vpop.permute.xlu0 %1035
      %v1037 = vsel %vm610, %v1036, %v858
      %1038 = vrot.lane.b32.xlu0 %v859, 64
      %v1039 = vpop.permute.xlu0 %1038
      %v1040 = vsel %vm610, %v1039, %v859
      %1041 = vrot.lane.b32.xlu0 %v860, 64
      %v1042 = vpop.permute.xlu0 %1041
      %v1043 = vsel %vm610, %v1042, %v860
      %1044 = vrot.lane.b32.xlu0 %v861, 64
      %v1045 = vpop.permute.xlu0 %1044
      %v1046 = vsel %vm610, %v1045, %v861
      %1047 = vrot.lane.b32.xlu0 %v1025, 64
      %v1048 = vpop.permute.xlu0 %1047
      %1049 = vrot.lane.b32.xlu0 %v1028, 64
      %v1050 = vpop.permute.xlu0 %1049
      %1051 = vrot.lane.b32.xlu0 %v1031, 64
      %v1052 = vpop.permute.xlu0 %1051
      %1053 = vrot.lane.b32.xlu0 %v1034, 64
      %v1054 = vpop.permute.xlu0 %1053
      %1055 = vrot.lane.b32.xlu0 %v1037, 64
      %v1056 = vpop.permute.xlu0 %1055
      %1057 = vrot.lane.b32.xlu0 %v1040, 64
      %v1058 = vpop.permute.xlu0 %1057
      %1059 = vrot.lane.b32.xlu0 %v1043, 64
      %v1060 = vpop.permute.xlu0 %1059
      %1061 = vrot.lane.b32.xlu0 %v1046, 64
      %v1062 = vpop.permute.xlu0 %1061
      %v1063 = vsel %vm610, %v1048, %v854
      %v1064 = vsel %vm610, %v1050, %v855
      %v1065 = vsel %vm610, %v1052, %v856
      %v1066 = vsel %vm610, %v1054, %v857
      %v1067 = vsel %vm610, %v1056, %v858
      %v1068 = vsel %vm610, %v1058, %v859
      %v1069 = vsel %vm610, %v1060, %v860
      %v1070 = vsel %vm610, %v1062, %v861
      %1079 = vrot.lane.b32.xlu0 %v1063, 65
      %v1080 = vpop.permute.xlu0 %1079
      %1081 = vrot.lane.b32.xlu0 %v1064, 65
      %v1082 = vpop.permute.xlu0 %1081
      %1083 = vrot.lane.b32.xlu0 %v1065, 65
      %v1084 = vpop.permute.xlu0 %1083
      %1085 = vrot.lane.b32.xlu0 %v1066, 65
      %v1086 = vpop.permute.xlu0 %1085
      %1087 = vrot.lane.b32.xlu0 %v1067, 65
      %v1088 = vpop.permute.xlu0 %1087
      %1089 = vrot.lane.b32.xlu0 %v1068, 65
      %v1090 = vpop.permute.xlu0 %1089
      %1091 = vrot.lane.b32.xlu0 %v1069, 65
      %v1092 = vpop.permute.xlu0 %1091
      %1093 = vrot.lane.b32.xlu0 %v1070, 65
      %v1094 = vpop.permute.xlu0 %1093
      %v1103 = vsel %vm660, %v1080, 0.0
      %v1104 = vsel %vm660, %v1082, 0.0
      %v1105 = vsel %vm660, %v1084, 0.0
      %v1106 = vsel %vm660, %v1086, 0.0
      %v1107 = vsel %vm660, %v1088, 0.0
      %v1108 = vsel %vm660, %v1090, 0.0
      %v1109 = vsel %vm660, %v1092, 0.0
      %v1110 = vsel %vm660, %v1094, 0.0
      %v1111 = vmax.f32 %v1015, %v1103
      %v1112 = vmax.f32 %v1016, %v1104
      %v1113 = vmax.f32 %v1017, %v1105
      %v1114 = vmax.f32 %v1018, %v1106
      %v1115 = vmax.f32 %v1019, %v1107
      %v1116 = vmax.f32 %v1020, %v1108
      %v1117 = vmax.f32 %v1021, %v1109
      %v1118 = vmax.f32 %v1022, %v1110
      %v1119 = vmax.f32 %v701, %v1111
      %v1120 = vmax.f32 %v702, %v1112
      %v1121 = vmax.f32 %v703, %v1113
      %v1122 = vmax.f32 %v704, %v1114
      %v1123 = vmax.f32 %v705, %v1115
      %v1124 = vmax.f32 %v706, %v1116
      %v1125 = vmax.f32 %v707, %v1117
      %v1126 = vmax.f32 %v708, %v1118
      %1127 = vrot.lane.b32.xlu0 %v1111, 64
      %v1128 = vpop.permute.xlu0 %1127
      %v1129 = vsel %vm610, %v1128, %v1111
      %1130 = vrot.lane.b32.xlu0 %v1112, 64
      %v1131 = vpop.permute.xlu0 %1130
      %v1132 = vsel %vm610, %v1131, %v1112
      %1133 = vrot.lane.b32.xlu0 %v1113, 64
      %v1134 = vpop.permute.xlu0 %1133
      %v1135 = vsel %vm610, %v1134, %v1113
      %1136 = vrot.lane.b32.xlu0 %v1114, 64
      %v1137 = vpop.permute.xlu0 %1136
      %v1138 = vsel %vm610, %v1137, %v1114
      %1139 = vrot.lane.b32.xlu0 %v1115, 64
      %v1140 = vpop.permute.xlu0 %1139
      %v1141 = vsel %vm610, %v1140, %v1115
      %1142 = vrot.lane.b32.xlu0 %v1116, 64
      %v1143 = vpop.permute.xlu0 %1142
      %v1144 = vsel %vm610, %v1143, %v1116
      %1145 = vrot.lane.b32.xlu0 %v1117, 64
      %v1146 = vpop.permute.xlu0 %1145
      %v1147 = vsel %vm610, %v1146, %v1117
      %1148 = vrot.lane.b32.xlu0 %v1118, 64
      %v1149 = vpop.permute.xlu0 %1148
      %v1150 = vsel %vm610, %v1149, %v1118
      %1151 = vrot.lane.b32.xlu0 %v1129, 64
      %v1152 = vpop.permute.xlu0 %1151
      %1153 = vrot.lane.b32.xlu0 %v1132, 64
      %v1154 = vpop.permute.xlu0 %1153
      %1155 = vrot.lane.b32.xlu0 %v1135, 64
      %v1156 = vpop.permute.xlu0 %1155
      %1157 = vrot.lane.b32.xlu0 %v1138, 64
      %v1158 = vpop.permute.xlu0 %1157
      %1159 = vrot.lane.b32.xlu0 %v1141, 64
      %v1160 = vpop.permute.xlu0 %1159
      %1161 = vrot.lane.b32.xlu0 %v1144, 64
      %v1162 = vpop.permute.xlu0 %1161
      %1163 = vrot.lane.b32.xlu0 %v1147, 64
      %v1164 = vpop.permute.xlu0 %1163
      %1165 = vrot.lane.b32.xlu0 %v1150, 64
      %v1166 = vpop.permute.xlu0 %1165
      %v1167 = vsel %vm610, %v1152, %v1111
      %v1168 = vsel %vm610, %v1154, %v1112
      %v1169 = vsel %vm610, %v1156, %v1113
      %v1170 = vsel %vm610, %v1158, %v1114
      %v1171 = vsel %vm610, %v1160, %v1115
      %v1172 = vsel %vm610, %v1162, %v1116
      %v1173 = vsel %vm610, %v1164, %v1117
      %v1174 = vsel %vm610, %v1166, %v1118
      %v1175 = vsel %vm203, 1, 0
      %vm1176 = vcmp.eq.s32.totalorder %v1175, 1
      %1185 = vrot.lane.b32.xlu0 %v1167, 72
      %v1186 = vpop.permute.xlu0 %1185
      %1187 = vrot.lane.b32.xlu0 %v1168, 72
      %v1188 = vpop.permute.xlu0 %1187
      %1189 = vrot.lane.b32.xlu0 %v1169, 72
      %v1190 = vpop.permute.xlu0 %1189
      %1191 = vrot.lane.b32.xlu0 %v1170, 72
      %v1192 = vpop.permute.xlu0 %1191
      %1193 = vrot.lane.b32.xlu0 %v1171, 72
      %v1194 = vpop.permute.xlu0 %1193
      %1195 = vrot.lane.b32.xlu0 %v1172, 72
      %v1196 = vpop.permute.xlu0 %1195
      %1197 = vrot.lane.b32.xlu0 %v1173, 72
      %v1198 = vpop.permute.xlu0 %1197
      %1199 = vrot.lane.b32.xlu0 %v1174, 72
      %v1200 = vpop.permute.xlu0 %1199
      %v1209 = vsel %vm1176, %v1186, 0.0
      %v1210 = vsel %vm1176, %v1188, 0.0
      %v1211 = vsel %vm1176, %v1190, 0.0
      %v1212 = vsel %vm1176, %v1192, 0.0
      %v1213 = vsel %vm1176, %v1194, 0.0
      %v1214 = vsel %vm1176, %v1196, 0.0
      %v1215 = vsel %vm1176, %v1198, 0.0
      %v1216 = vsel %vm1176, %v1200, 0.0
      %v1217 = vmax.f32 %v1119, %v1209
      %v1218 = vmax.f32 %v1120, %v1210
      %v1219 = vmax.f32 %v1121, %v1211
      %v1220 = vmax.f32 %v1122, %v1212
      %v1221 = vmax.f32 %v1123, %v1213
      %v1222 = vmax.f32 %v1124, %v1214
      %v1223 = vmax.f32 %v1125, %v1215
      %v1224 = vmax.f32 %v1126, %v1216
      %vm1225 = vcmask 523264
      %1226 = vst.msk [vmem:[%s170] sm:$0xff] %vm1225, %v1217
      %1227 = vst.msk [vmem:[%s170 + $0x8] sm:$0xff] %vm1225, %v1218
      %1228 = vst.msk [vmem:[%s170 + $0x10] sm:$0xff] %vm1225, %v1219
      %1229 = vst.msk [vmem:[%s170 + $0x18] sm:$0xff] %vm1225, %v1220
      %1230 = vst.msk [vmem:[%s170 + $0x20] sm:$0xff] %vm1225, %v1221
      %1231 = vst.msk [vmem:[%s170 + $0x28] sm:$0xff] %vm1225, %v1222
      %1232 = vst.msk [vmem:[%s170 + $0x30] sm:$0xff] %vm1225, %v1223
      %1233 = vst.msk [vmem:[%s170 + $0x38] sm:$0xff] %vm1225, %v1224
      %p1234 = scmp.lt.s32.totalorder %s14, 1
      %s1235 = scalar_select %p1234, %s14, 1
      %s1236 = smul.addr %s1235, 8
      %s1237 = smul.addr %s1236, 8
      %s1238 = scalar_lea.vmem %s3, %s1237
      // Predicated region
      $region33: #{visible_module_forward.1} parent=31 // pred_check
        %p1239 = pneg %p100
      $region34: #{visible_module_forward.1} parent=31 // pred_check_branch
        %1241 = sbr.rel (%p1239) target = $region36
      $region35: #{visible_module_forward.1} parent=31 // pred_region
        _
      $region36: #{visible_module_forward.1} parent=31 // pred_fallthru
        _
    $region32: #{visible_module_forward.1} parent=5 // pred_fallthru
      _
    %p1242 = scmp.le.s32.totalorder 2, %s9
    // Predicated region
    $region37: #{visible_module_forward.1} parent=5 // pred_check
      %p1243 = pneg %p1242
    $region38: #{visible_module_forward.1} parent=5 // pred_check_branch
      %1245 = sbr.rel (%p1243) target = $region40
    $region39: #{visible_module_forward.1} parent=5 // pred_region
      %s1246 = ssub.s32 %s9, 2
      // Predicated region
      $region41: #{visible_module_forward.1} parent=39 // pred_check
        %p1247 = pneg %p106
      $region42: #{visible_module_forward.1} parent=39 // pred_check_branch
        %1249 = sbr.rel (%p1247) target = $region44
      $region43: #{visible_module_forward.1} parent=39 // pred_region
        %p1250 = scmp.lt.s32.totalorder %s15, 1
        %s1251 = scalar_select %p1250, %s15, 1
        %s1252 = smul.addr %s1251, 8
        %s1253 = smul.addr %s1252, 8
        %s1254 = scalar_lea.vmem %s3, %s1253
      $region44: #{visible_module_forward.1} parent=39 // pred_fallthru
        _
    $region40: #{visible_module_forward.1} parent=5 // pred_fallthru
      _
  $region6: #{visible_module_forward.1} parent=0 // loop_footer
    %s13 = sadd.s32 1, %s9
  $region7: #{visible_module_forward.1} parent=0 // loop_footer_branch
    %8 = sbr.rel target = $region3
  $region8: #{visible_module_forward.1} parent=0 // loop_exit
    _

</llo_original>
